<compile_context>
chip_gen: v7x
topology: tpu7x:2x2x1
jax: 0.10.0
libtpu: 0.0.40
codegen_flags: <defaults>
</compile_context>

<pallas_src>
import functools

import jax
import jax.numpy as jnp
from jax import lax
from jax.experimental import pallas as pl
from jax.experimental.pallas import tpu as pltpu


# ------------------------ generation-aware sizing ----------------------------
def _detect_vmem_capacity_bytes():
    """Physical VMEM per core; conservative 64 MiB (v7x) fallback."""
    try:
        info = pltpu.get_tpu_info()
        for name in ("vmem_capacity_bytes", "vmem_size_bytes", "vmem_bytes"):
            v = getattr(info, name, None)
            if v:
                return int(v)
    except Exception:
        pass
    return 64 * 1024 * 1024


_VMEM_CAP = _detect_vmem_capacity_bytes()
# Leave ~25% headroom for compiler scratch / pipeline slack.
_VMEM_LIMIT = int(min(_VMEM_CAP - _VMEM_CAP // 4, 100 * 1024 * 1024))
_BIG_VMEM = _VMEM_CAP >= 100 * 1024 * 1024            # 128 MiB parts (v5e/v6e)

_MM_TM = 1024 if _BIG_VMEM else 512
_MM_TN = 1024 if _BIG_VMEM else 512
_MM_TK = 512
_NORM_TT = 512 if _BIG_VMEM else 256
_ATTN_TQ = 256
_ATTN_TK = 256


def _fit_tile(dim, preferred):
    """Largest tile <= preferred that divides dim (falls back to full extent)."""
    t = min(preferred, dim)
    while t > 1 and dim % t != 0:
        t //= 2
    return t if (t > 0 and dim % t == 0) else dim


# ----------------------------- matmul kernels --------------------------------
def _matmul_kernel(x_ref, w_ref, o_ref, acc_ref):
    @pl.when(pl.program_id(2) == 0)
    def _():
        acc_ref[...] = jnp.zeros_like(acc_ref)

    acc_ref[...] += jnp.dot(x_ref[...], w_ref[...],
                            preferred_element_type=jnp.float32)

    @pl.when(pl.program_id(2) == pl.num_programs(2) - 1)
    def _():
        o_ref[...] = acc_ref[...].astype(o_ref.dtype)


def _matmul_bias_kernel(x_ref, w_ref, b_ref, o_ref, acc_ref):
    @pl.when(pl.program_id(2) == 0)
    def _():
        acc_ref[...] = jnp.zeros_like(acc_ref)

    acc_ref[...] += jnp.dot(x_ref[...], w_ref[...],
                            preferred_element_type=jnp.float32)

    @pl.when(pl.program_id(2) == pl.num_programs(2) - 1)
    def _():
        o_ref[...] = (acc_ref[...]
                      + b_ref[...].astype(jnp.float32)).astype(o_ref.dtype)


def matmul(x, w, bias=None, *, tm=_MM_TM, tn=_MM_TN, tk=_MM_TK):
    """x: [M, K] @ w: [K, N] (+ bias[N]) -> [M, N]. bf16 in, f32 acc."""
    M, K = x.shape
    K2, N = w.shape
    assert K == K2
    tm = _fit_tile(M, tm)
    tn = _fit_tile(N, tn)
    tk = _fit_tile(K, tk)

    grid = (M // tm, N // tn, K // tk)
    cp = pltpu.CompilerParams(
        dimension_semantics=("parallel", "parallel", "arbitrary"),
        vmem_limit_bytes=_VMEM_LIMIT)

    if bias is None:
        return pl.pallas_call(
            _matmul_kernel,
            out_shape=jax.ShapeDtypeStruct((M, N), x.dtype),
            grid_spec=pltpu.PrefetchScalarGridSpec(
                num_scalar_prefetch=0,
                grid=grid,
                in_specs=[pl.BlockSpec((tm, tk), lambda i, j, k: (i, k)),
                          pl.BlockSpec((tk, tn), lambda i, j, k: (k, j))],
                out_specs=pl.BlockSpec((tm, tn), lambda i, j, k: (i, j)),
                scratch_shapes=[pltpu.VMEM((tm, tn), jnp.float32)]),
            compiler_params=cp,
        )(x, w)

    return pl.pallas_call(
        _matmul_bias_kernel,
        out_shape=jax.ShapeDtypeStruct((M, N), x.dtype),
        grid_spec=pltpu.PrefetchScalarGridSpec(
            num_scalar_prefetch=0,
            grid=grid,
            in_specs=[pl.BlockSpec((tm, tk), lambda i, j, k: (i, k)),
                      pl.BlockSpec((tk, tn), lambda i, j, k: (k, j)),
                      pl.BlockSpec((1, tn), lambda i, j, k: (0, j))],
            out_specs=pl.BlockSpec((tm, tn), lambda i, j, k: (i, j)),
            scratch_shapes=[pltpu.VMEM((tm, tn), jnp.float32)]),
        compiler_params=cp,
    )(x, w, bias[None, :])


# ---------------- fused gate/up matmul + SiLU-and-mul epilogue ---------------
def _gate_up_silu_kernel(x_ref, wg_ref, wu_ref, o_ref, accg_ref, accu_ref):
    @pl.when(pl.program_id(2) == 0)
    def _():
        accg_ref[...] = jnp.zeros_like(accg_ref)
        accu_ref[...] = jnp.zeros_like(accu_ref)

    x = x_ref[...]
    accg_ref[...] += jnp.dot(x, wg_ref[...], preferred_element_type=jnp.float32)
    accu_ref[...] += jnp.dot(x, wu_ref[...], preferred_element_type=jnp.float32)

    @pl.when(pl.program_id(2) == pl.num_programs(2) - 1)
    def _():
        g = accg_ref[...]
        u = accu_ref[...]
        sig = 1.0 / (1.0 + jnp.exp(-g))
        o_ref[...] = (g * sig * u).astype(o_ref.dtype)


def gate_up_silu(x, w_gate, w_up, *, tm=_MM_TM, tn=_MM_TN, tk=_MM_TK):
    """silu(x @ w_gate) * (x @ w_up) -> [M, F], fused in one kernel."""
    M, K = x.shape
    K2, F = w_gate.shape
    assert K == K2 and w_up.shape == (K, F)
    # Dual f32 accumulators -> cap tiles harder on the 64 MiB-VMEM part.
    if not _BIG_VMEM:
        tm, tn = min(tm, 512), min(tn, 512)
    tm = _fit_tile(M, tm)
    tn = _fit_tile(F, tn)
    tk = _fit_tile(K, tk)

    return pl.pallas_call(
        _gate_up_silu_kernel,
        out_shape=jax.ShapeDtypeStruct((M, F), x.dtype),
        grid_spec=pltpu.PrefetchScalarGridSpec(
            num_scalar_prefetch=0,
            grid=(M // tm, F // tn, K // tk),
            in_specs=[pl.BlockSpec((tm, tk), lambda i, j, k: (i, k)),
                      pl.BlockSpec((tk, tn), lambda i, j, k: (k, j)),
                      pl.BlockSpec((tk, tn), lambda i, j, k: (k, j))],
            out_specs=pl.BlockSpec((tm, tn), lambda i, j, k: (i, j)),
            scratch_shapes=[pltpu.VMEM((tm, tn), jnp.float32),
                            pltpu.VMEM((tm, tn), jnp.float32)]),
        compiler_params=pltpu.CompilerParams(
            dimension_semantics=("parallel", "parallel", "arbitrary"),
            vmem_limit_bytes=_VMEM_LIMIT),
    )(x, w_gate, w_up)


# ----------------------------- RMSNorm kernels -------------------------------
def _rmsnorm_kernel(eps, x_ref, w_ref, o_ref):
    x = x_ref[...].astype(jnp.float32)
    var = jnp.mean(x * x, axis=-1, keepdims=True)
    o_ref[...] = (x * lax.rsqrt(var + eps)
                  * w_ref[...].astype(jnp.float32)).astype(o_ref.dtype)


def rmsnorm(x, w, eps, *, tt=_NORM_TT):
    T, H = x.shape
    tt = _fit_tile(T, tt)
    return pl.pallas_call(
        functools.partial(_rmsnorm_kernel, eps),
        out_shape=jax.ShapeDtypeStruct((T, H), x.dtype),
        grid=(T // tt,),
        in_specs=[pl.BlockSpec((tt, H), lambda i: (i, 0)),
                  pl.BlockSpec((1, H), lambda i: (0, 0))],
        out_specs=pl.BlockSpec((tt, H), lambda i: (i, 0)),
        compiler_params=pltpu.CompilerParams(
            dimension_semantics=("parallel",),
            vmem_limit_bytes=_VMEM_LIMIT),
    )(x, w[None, :])


def _rmsnorm_res_kernel(eps, x_ref, r_ref, w_ref, o_ref, r_out_ref):
    x = x_ref[...].astype(jnp.float32) + r_ref[...].astype(jnp.float32)
    r_out_ref[...] = x.astype(r_out_ref.dtype)
    var = jnp.mean(x * x, axis=-1, keepdims=True)
    o_ref[...] = (x * lax.rsqrt(var + eps)
                  * w_ref[...].astype(jnp.float32)).astype(o_ref.dtype)


def rmsnorm_res(x, residual, w, eps, *, tt=_NORM_TT):
    """Fused residual-add + RMSNorm -> (normed, new_residual)."""
    T, H = x.shape
    tt = _fit_tile(T, tt)
    return pl.pallas_call(
        functools.partial(_rmsnorm_res_kernel, eps),
        out_shape=(jax.ShapeDtypeStruct((T, H), x.dtype),
                   jax.ShapeDtypeStruct((T, H), x.dtype)),
        grid=(T // tt,),
        in_specs=[pl.BlockSpec((tt, H), lambda i: (i, 0)),
                  pl.BlockSpec((tt, H), lambda i: (i, 0)),
                  pl.BlockSpec((1, H), lambda i: (0, 0))],
        out_specs=(pl.BlockSpec((tt, H), lambda i: (i, 0)),
                   pl.BlockSpec((tt, H), lambda i: (i, 0))),
        compiler_params=pltpu.CompilerParams(
            dimension_semantics=("parallel",),
            vmem_limit_bytes=_VMEM_LIMIT),
    )(x, residual, w[None, :])


# -------------------- flash-style causal GQA attention -----------------------
def _flash_attn_kernel(scale, group, head_dim, q_ref, k_ref, v_ref, o_ref,
                       m_sc, l_sc, acc_sc):
    qi = pl.program_id(0)
    ki = pl.program_id(2)
    tq = q_ref.shape[0]
    tk = k_ref.shape[0]

    @pl.when(ki == 0)
    def _():
        m_sc[...] = jnp.full(m_sc.shape, -jnp.inf, jnp.float32)
        l_sc[...] = jnp.zeros(l_sc.shape, jnp.float32)
        acc_sc[...] = jnp.zeros(acc_sc.shape, jnp.float32)

    # Compute only tiles at/below the causal diagonal (K/V DMA for skipped
    # tiles is also elided via the clamped index map in the BlockSpec).
    @pl.when(ki * tk < (qi + 1) * tq)
    def _():
        q_all = q_ref[...]                           # (tq, group*D) bf16
        k = k_ref[...]                               # (tk, D) bf16
        v = v_ref[...]                               # (tk, D) bf16
        row = qi * tq + lax.broadcasted_iota(jnp.int32, (tq, tk), 0)
        col = ki * tk + lax.broadcasted_iota(jnp.int32, (tq, tk), 1)
        causal = col <= row                          # shared across the group

        for g in range(group):                       # static unrolled GQA group
            q_g = q_all[:, g * head_dim:(g + 1) * head_dim]
            s = lax.dot_general(q_g, k, (((1,), (1,)), ((), ())),
                                preferred_element_type=jnp.float32) * scale
            s = jnp.where(causal, s, jnp.float32(-1e30))

            m_prev = m_sc[g]
            m_new = jnp.maximum(m_prev, jnp.max(s, axis=-1, keepdims=True))
            alpha = jnp.exp(m_prev - m_new)
            p = jnp.exp(s - m_new)
            l_sc[g] = alpha * l_sc[g] + jnp.sum(p, axis=-1, keepdims=True)
            acc_sc[g] = alpha * acc_sc[g] + jnp.dot(
                p.astype(v.dtype), v, preferred_element_type=jnp.float32)
            m_sc[g] = m_new

    @pl.when(ki == pl.num_programs(2) - 1)
    def _():
        for g in range(group):
            inv_l = pl.reciprocal(l_sc[g], approx=True)
            o_ref[:, g * head_dim:(g + 1) * head_dim] = (
                acc_sc[g] * inv_l).astype(o_ref.dtype)


def attention(q, k, v, scale, *, num_q_heads, num_kv_heads, head_dim,
              tq=_ATTN_TQ, tk=_ATTN_TK):
    """q: [T, Hq*D], k/v: [T, Hkv*D] -> [T, Hq*D] (causal, GQA, token-major)."""
    T = q.shape[0]
    D = head_dim
    group = num_q_heads // num_kv_heads
    assert q.shape == (T, num_q_heads * D)
    assert k.shape == (T, num_kv_heads * D) and v.shape == k.shape
    tq = _fit_tile(T, tq)
    tk = _fit_tile(T, tk)
    q_blk = group * D
    # Lane-dim BlockSpec constraint (multiple of 128 or full width).
    assert q_blk % 128 == 0 or num_kv_heads == 1
    assert D % 128 == 0 or num_kv_heads == 1

    def kv_index(qi, kvh, ki):
        # Clamp above-diagonal tiles to the last needed tile so Pallas does not
        # issue a fresh K/V DMA for tiles the kernel will skip.
        last = ((qi + 1) * tq - 1) // tk
        return (jnp.minimum(ki, last), kvh)

    return pl.pallas_call(
        functools.partial(_flash_attn_kernel, scale, group, D),
        out_shape=jax.ShapeDtypeStruct((T, num_q_heads * D), q.dtype),
        grid_spec=pltpu.PrefetchScalarGridSpec(
            num_scalar_prefetch=0,
            # qi first so the leading parallel axis is large (megacore on v7x).
            grid=(T // tq, num_kv_heads, T // tk),
            in_specs=[
                pl.BlockSpec((tq, q_blk), lambda qi, kvh, ki: (qi, kvh)),
                pl.BlockSpec((tk, D), kv_index),
                pl.BlockSpec((tk, D), kv_index),
            ],
            out_specs=pl.BlockSpec((tq, q_blk), lambda qi, kvh, ki: (qi, kvh)),
            scratch_shapes=[pltpu.VMEM((group, tq, 1), jnp.float32),
                            pltpu.VMEM((group, tq, 1), jnp.float32),
                            pltpu.VMEM((group, tq, D), jnp.float32)]),
        compiler_params=pltpu.CompilerParams(
            dimension_semantics=("parallel", "parallel", "arbitrary"),
            vmem_limit_bytes=_VMEM_LIMIT),
    )(q, k, v)


# --------------------- GLM partial RoPE (offline permutation) ----------------
def _glm_rope_column_perm(num_q_heads, num_kv_heads, head_dim):
    """Column permutation of wqkv so q/k rope channels come out de-interleaved.

    Attention scores are invariant to a consistent per-head channel permutation
    of q and k (v untouched), so the runtime _extract_rope/_fill_rope shuffles
    of the original module become a one-time weight permutation.
    """
    half = head_dim // 2
    per_head = jnp.concatenate([jnp.arange(0, half, 2, dtype=jnp.int32),
                                jnp.arange(1, half, 2, dtype=jnp.int32),
                                jnp.arange(half, head_dim, dtype=jnp.int32)])
    qk = jnp.concatenate([per_head + h * head_dim
                          for h in range(num_q_heads + num_kv_heads)])
    v_off = (num_q_heads + num_kv_heads) * head_dim
    v_cols = v_off + jnp.arange(num_kv_heads * head_dim, dtype=jnp.int32)
    return jnp.concatenate([qk, v_cols])


def rotary_pos_emb(positions, cfg):
    # build_rotary_embedding(rotary_dim // 2, 1<<20, 10000*rope_ratio, LinearScaling)
    dim = cfg["kv_channels"] // 2
    base = 10000.0 * cfg["rope_ratio"]
    inv_freq = 1.0 / (base ** (jnp.arange(0, dim, 2, dtype=jnp.float32) / dim))
    pos = positions.astype(jnp.float32)          # LinearScaling factor = 1.0
    freqs = pos[:, None] * inv_freq[None, :]
    emb = jnp.concatenate([freqs, freqs], axis=-1)       # [T, D/2]
    return jnp.cos(emb), jnp.sin(emb)


def apply_partial_rope(x2d, cos, sin, n_heads, head_dim):
    """x2d: [T, n_heads*D]; rope channels (first D/2 per head) are already
    de-interleaved thanks to the offline weight permutation."""
    T = x2d.shape[0]
    half = head_dim // 2
    x = x2d.reshape(T, n_heads, head_dim)
    rope = x[..., :half].astype(jnp.float32)
    c = cos[:, None, :]
    s = sin[:, None, :]
    r1, r2 = jnp.split(rope, 2, axis=-1)
    rot = jnp.concatenate([-r2, r1], axis=-1)
    roped = (rope * c + rot * s).astype(x.dtype)
    out = jnp.concatenate([roped, x[..., half:]], axis=-1)
    return out.reshape(T, n_heads * head_dim)


# ------------------------------ model wrapper ---------------------------------
def self_attention_block(x, cos, sin, layer, cfg):
    Hq, Hkv, D = cfg["num_heads"], cfg["num_kv_heads"], cfg["head_size"]
    q_size, kv_size = Hq * D, Hkv * D

    qkv = matmul(x, layer["wqkv"], layer["bqkv"])          # fused bias epilogue
    q = qkv[:, :q_size]
    k = qkv[:, q_size:q_size + kv_size]
    v = qkv[:, q_size + kv_size:]

    q = apply_partial_rope(q, cos, sin, Hq, D)
    k = apply_partial_rope(k, cos, sin, Hkv, D)

    scale = float(D) ** -0.5
    o = attention(q, k, v, scale, num_q_heads=Hq, num_kv_heads=Hkv,
                  head_dim=D)                              # [T, Hq*D]
    return matmul(o, layer["wdense"])


def chatglm_forward(params, input_ids, position_ids, cfg):
    x = jnp.take(params["embedding"], input_ids, axis=0)   # [B, T, H] bf16
    B, T, H = x.shape
    h = x.reshape(B * T, H)
    pos = position_ids.reshape(-1)
    cos, sin = rotary_pos_emb(pos, cfg)                    # [T, D/2] f32

    residual = None
    for layer in params["layers"]:
        if residual is None:
            residual = h
            ln_out = rmsnorm(h, layer["input_ln"], cfg["eps"])
        else:
            ln_out, residual = rmsnorm_res(h, residual, layer["input_ln"],
                                           cfg["eps"])
        attn_out = self_attention_block(ln_out, cos, sin, layer, cfg)
        ln_out, residual = rmsnorm_res(attn_out, residual, layer["post_ln"],
                                       cfg["eps"])
        act = gate_up_silu(ln_out, layer["w_gate"], layer["w_up"])
        h = matmul(act, layer["w_4h_to_h"])

    h, _ = rmsnorm_res(h, residual, params["final_ln"], cfg["eps"])  # post LN
    return h.reshape(B, T, H)


def init_params(key, cfg):
    H, F, V = cfg["hidden"], cfg["ffn"], cfg["vocab"]
    Hq, Hkv, D = cfg["num_heads"], cfg["num_kv_heads"], cfg["head_size"]
    q_size, kv_size = Hq * D, Hkv * D
    std = 0.02

    def nrm(k, shape):
        return (std * jax.random.normal(k, shape, dtype=jnp.float32)
                ).astype(jnp.bfloat16)

    perm = _glm_rope_column_perm(Hq, Hkv, D)       # offline RoPE de-interleave

    keys = jax.random.split(key, 2 + 7 * cfg["num_layers"])
    params = {"embedding": nrm(keys[0], (V, H)),
              "final_ln": jnp.ones((H,), jnp.float32),
              "layers": []}
    ki = 2
    for _ in range(cfg["num_layers"]):
        wqkv = nrm(keys[ki + 0], (H, q_size + 2 * kv_size))
        bqkv = nrm(keys[ki + 1], (q_size + 2 * kv_size,))   # add_qkv_bias
        layer = {
            "input_ln": jnp.ones((H,), jnp.float32),
            "post_ln": jnp.ones((H,), jnp.float32),
            "wqkv": wqkv[:, perm],
            "bqkv": bqkv[perm],
            "wdense": nrm(keys[ki + 2], (q_size, H)),
            "w_gate": nrm(keys[ki + 3], (H, F)),   # dense_h_to_4h [gate | up]
            "w_up": nrm(keys[ki + 4], (H, F)),
            "w_4h_to_h": nrm(keys[ki + 5], (F, H)),
        }
        params["layers"].append(layer)
        ki += 7
    return params


if __name__ == "__main__":
    cfg = dict(
        vocab=128,          # padded_vocab_size
        hidden=128,         # hidden_size
        num_layers=2,
        num_heads=2,        # num_attention_heads
        kv_channels=64,     # -> head_size = 64, projection_size = 128
        head_size=64,
        num_kv_heads=1,     # multi_query_attention, multi_query_group_num=1
        ffn=256,            # ffn_hidden_size
        eps=1e-5,           # layernorm_epsilon
        rope_ratio=1.0,
    )
    key = jax.random.PRNGKey(0)
    k_params, k_ids = jax.random.split(key)
    params = init_params(k_params, cfg)

    # T=512 exercises multi-tile flash attention (qi=2, ki=2) including the
    # above-diagonal compute skip + clamped K/V DMA path.
    B, T = 1, 512
    input_ids = jax.random.randint(k_ids, (B, T), 0, cfg["vocab"],
                                   dtype=jnp.int32)
    position_ids = jnp.arange(T, dtype=jnp.int32)[None, :]

    out = chatglm_forward(params, input_ids, position_ids, cfg)
    out = jax.block_until_ready(out)
    assert out.shape == (B, T, cfg["hidden"])
    assert bool(jnp.all(jnp.isfinite(out.astype(jnp.float32))))
    print("KERNEL_OK")
</pallas_src>

<mosaic_0001>
module attributes {stable_mosaic.version = 11 : i64} {
  func.func @_rmsnorm_kernel(%arg0: i32, %arg1: memref<256x128xbf16, #tpu.memory_space<vmem>>, %arg2: memref<1x128xf32, #tpu.memory_space<vmem>>, %arg3: memref<256x128xbf16, #tpu.memory_space<vmem>>) attributes {dimension_semantics = [#tpu.dimension_semantics<parallel>], iteration_bounds = array<i64: 2>, scalar_prefetch = 0 : i64, scratch_operands = 0 : i64, tpu.core_type = #tpu.core_type<tc>, window_params = [{transform_indices = @transform_0, window_bounds = array<i64: 256, 128>}, {pipeline_mode = #tpu.pipeline_mode<synchronous>, transform_indices = @transform_1, window_bounds = array<i64: 1, 128>}, {transform_indices = @transform_2, window_bounds = array<i64: 256, 128>}]} {
    %c0 = arith.constant 0 : index
    %c0_0 = arith.constant 0 : index
    %0 = vector.load %arg1[%c0, %c0_0] : memref<256x128xbf16, #tpu.memory_space<vmem>>, vector<256x128xbf16>
    %1 = arith.extf %0 : vector<256x128xbf16> to vector<256x128xf32>
    %2 = arith.mulf %1, %1 : vector<256x128xf32>
    %cst = arith.constant dense<0.000000e+00> : vector<256xf32>
    %3 = vector.multi_reduction <add>, %2, %cst [1] : vector<256x128xf32> to vector<256xf32>
    %4 = vector.shape_cast %3 : vector<256xf32> to vector<256x1xf32>
    %cst_1 = arith.constant 1.280000e+02 : f32
    %5 = vector.broadcast %cst_1 : f32 to vector<256x1xf32>
    %6 = arith.divf %4, %5 : vector<256x1xf32>
    %cst_2 = arith.constant 9.99999974E-6 : f32
    %7 = vector.broadcast %cst_2 : f32 to vector<256x1xf32>
    %8 = arith.addf %6, %7 : vector<256x1xf32>
    %9 = math.rsqrt %8 : vector<256x1xf32>
    %10 = vector.broadcast %9 : vector<256x1xf32> to vector<256x128xf32>
    %11 = arith.mulf %1, %10 : vector<256x128xf32>
    %c0_3 = arith.constant 0 : index
    %c0_4 = arith.constant 0 : index
    %12 = vector.load %arg2[%c0_3, %c0_4] : memref<1x128xf32, #tpu.memory_space<vmem>>, vector<1x128xf32>
    %13 = vector.broadcast %12 : vector<1x128xf32> to vector<256x128xf32>
    %14 = arith.mulf %11, %13 : vector<256x128xf32>
    %15 = arith.truncf %14 : vector<256x128xf32> to vector<256x128xbf16>
    %c0_5 = arith.constant 0 : index
    %c0_6 = arith.constant 0 : index
    %16 = vector.load %arg3[%c0_5, %c0_6] : memref<256x128xbf16, #tpu.memory_space<vmem>>, vector<256x128xbf16>
    tpu.vector_store %arg3[%c0_5, %c0_6], %15 {strides = array<i32>} : memref<256x128xbf16, #tpu.memory_space<vmem>>, vector<256x128xbf16>,
    return
  }
  func.func @transform_0(%arg0: i32) -> (i32, i32) {
    %c0_i32 = arith.constant 0 : i32
    %c0_i32_0 = arith.constant 0 : i32
    return %arg0, %c0_i32 : i32, i32
  }
  func.func @transform_1(%arg0: i32) -> (i32, i32) {
    %c0_i32 = arith.constant 0 : i32
    %c0_i32_0 = arith.constant 0 : i32
    %c0_i32_1 = arith.constant 0 : i32
    return %c0_i32, %c0_i32_0 : i32, i32
  }
  func.func @transform_2(%arg0: i32) -> (i32, i32) {
    %c0_i32 = arith.constant 0 : i32
    %c0_i32_0 = arith.constant 0 : i32
    return %arg0, %c0_i32 : i32, i32
  }
}

</mosaic_0001>

<llo_original>
// kernel: tpu_custom_call.1
$region0: #{tpu_custom_call.1}
  #allocation0 [shape = 'u32[]', space=smem, size = 0x4, offset = 0x4, fixed_abs, tag = 'smem constant byte address 0x4 - core index']
  #allocation1 [shape = 'u32[144,128]{1,0:T(1,128)}', space=vmem, size = 0x12000, scoped, tag = 'internal scratch']
  %s0 = inlined_call_operand.hbm [shape: bf16[512,128], index: 0, kind: input, shape index: {}]
  %s1 = inlined_call_operand.vmem [shape: f32[1,128], index: 1, kind: input, shape index: {}]
  %s2 = inlined_call_operand.hbm [shape: bf16[512,128], index: 2, kind: output, shape index: {}]
  %s3 = sld [smem:[#allocation0]]
  $region45: #{tpu_custom_call.1} parent=0
    _
  %s5 = ssub.s32 1, %s3
  %s6 = scalar_select 0, %s5, %s3
  $region1: #{tpu_custom_call.1} parent=0
    #allocation2 [shape = 'u8[131072]{0}', space=vmem, size = 0x20000, scoped, tag = 'input window, operand 0']
    #allocation3 [shape = 's32[2]{0}', space=sflag, size = 0x8, scoped, tag = 'scoped memory for tpu_custom_call.1']
    #allocation4 [shape = 's32[2]{0}', space=sflag, size = 0x8, scoped, tag = 'scoped memory for tpu_custom_call.1']
    #allocation5 [shape = 'u8[131072]{0}', space=vmem, size = 0x20000, scoped, tag = 'output window, operand 0']
    %7 = vsyncpa [#allocation3], 0
    %s8 = scalar_lea.sflag [#allocation3], 1
    %9 = vsyncpa %s8, 0
    %10 = vsyncpa [#allocation4], 0
    %s11 = scalar_lea.sflag [#allocation4], 1
    %12 = vsyncpa %s11, 0
    loop: start=0, step=1, limit=4
    $region2: #{tpu_custom_call.1} parent=1 // loop_pre_header
      _
    $region3: #{tpu_custom_call.1} parent=1 // loop_header
      %s14 = sphi 0, %s18
      %p15 = scmp.ge.s32.totalorder %s14, 4
      %s24 = sphi 0, %s26
      %s27 = sphi 0, %s24
      %s28 = sphi 0, %s27
      %s44 = sphi 0, %s28
      %s48 = sphi 0, %s48
      %s50 = sphi 0, %s48
      %s51 = sphi 0, %s50
      %s65 = sphi 0, %s51
      %s71 = sphi 0, %s73
      %s74 = sphi 0, %s71
      %s75 = sphi 0, %s74
      %s91 = sphi 0, %s75
    $region4: #{tpu_custom_call.1} parent=1 // loop_header_branch
      %17 = sbr.rel (%p15) target = $region8
    $region5: #{tpu_custom_call.1} parent=1 // loop_body
      %s19 = ssub.s32 %s14, 1
      %s20 = ssub.s32 %s14, 2
      %s21 = sadd.s32 %s14, 1
      %s22 = ssub.s32 %s14, %s21
      %p23 = scmp.eq.s32.totalorder %s22, 0
      %s25 = sadd.s32 %s24, 1
      %s26 = scalar_select %p23, %s24, %s25
      %p29 = pneg %p23
      %p30 = scmp.eq.s32.totalorder %s14, 1
      %p31 = por %p29, %p30
      %p32 = scmp.ne.s32.totalorder %s24, %s27
      %p33 = scmp.eq.s32.totalorder %s14, 0
      %p34 = por %p32, %p33
      %p35 = scmp.ne.s32.totalorder %s24, %s27
      %p36 = scmp.eq.s32.totalorder %s19, 1
      %p37 = por %p35, %p36
      %p38 = scmp.ne.s32.totalorder %s27, %s28
      %p39 = scmp.eq.s32.totalorder %s19, 0
      %p40 = por %p38, %p39
      %p41 = scmp.ne.s32.totalorder %s27, %s28
      %p42 = scmp.eq.s32.totalorder %s20, 1
      %p43 = por %p41, %p42
      %p45 = scmp.ne.s32.totalorder %s28, %s44
      %p46 = scmp.eq.s32.totalorder %s20, 0
      %p47 = por %p45, %p46
      %s49 = sadd.s32 %s48, 1
      %p52 = scmp.eq.s32.totalorder %s14, 1
      %p53 = scmp.ne.s32.totalorder %s48, %s50
      %p54 = scmp.eq.s32.totalorder %s14, 0
      %p55 = por %p53, %p54
      %p56 = scmp.ne.s32.totalorder %s48, %s50
      %p57 = scmp.eq.s32.totalorder %s19, 1
      %p58 = por %p56, %p57
      %p59 = scmp.ne.s32.totalorder %s50, %s51
      %p60 = scmp.eq.s32.totalorder %s19, 0
      %p61 = por %p59, %p60
      %p62 = scmp.ne.s32.totalorder %s50, %s51
      %p63 = scmp.eq.s32.totalorder %s20, 1
      %p64 = por %p62, %p63
      %p66 = scmp.ne.s32.totalorder %s51, %s65
      %p67 = scmp.eq.s32.totalorder %s20, 0
      %p68 = por %p66, %p67
      %s69 = ssub.s32 %s14, %s21
      %p70 = scmp.eq.s32.totalorder %s69, 0
      %s72 = sadd.s32 %s71, 1
      %s73 = scalar_select %p70, %s71, %s72
      %p76 = pneg %p70
      %p77 = scmp.eq.s32.totalorder %s14, 1
      %p78 = por %p76, %p77
      %p79 = scmp.ne.s32.totalorder %s71, %s74
      %p80 = scmp.eq.s32.totalorder %s14, 0
      %p81 = por %p79, %p80
      %p82 = scmp.ne.s32.totalorder %s71, %s74
      %p83 = scmp.eq.s32.totalorder %s19, 1
      %p84 = por %p82, %p83
      %p85 = scmp.ne.s32.totalorder %s74, %s75
      %p86 = scmp.eq.s32.totalorder %s19, 0
      %p87 = por %p85, %p86
      %p88 = scmp.ne.s32.totalorder %s74, %s75
      %p89 = scmp.eq.s32.totalorder %s20, 1
      %p90 = por %p88, %p89
      %p92 = scmp.ne.s32.totalorder %s75, %s91
      %p93 = scmp.eq.s32.totalorder %s20, 0
      %p94 = por %p92, %p93
      %p95 = scmp.le.s32.totalorder 1, %s14
      %p96 = scmp.lt.s32.totalorder %s14, 3
      %p97 = pnand %p95, %p96
      %p98 = pneg %p97
      // Predicated region
      $region9: #{tpu_custom_call.1} parent=5 // pred_check
        _
      $region10: #{tpu_custom_call.1} parent=5 // pred_check_branch
        %100 = sbr.rel (%p97) target = $region12
      $region11: #{tpu_custom_call.1} parent=5 // pred_region
        %s101 = ssub.s32 %s14, 1
        // Predicated region
        $region13: #{tpu_custom_call.1} parent=11 // pred_check
          %p102 = pneg %p61
        $region14: #{tpu_custom_call.1} parent=11 // pred_check_branch
          %104 = sbr.rel (%p102) target = $region16
        $region15: #{tpu_custom_call.1} parent=11 // pred_region
          _
        $region16: #{tpu_custom_call.1} parent=11 // pred_fallthru
          _
      $region12: #{tpu_custom_call.1} parent=5 // pred_fallthru
        _
      %p105 = scmp.lt.s32.totalorder %s14, 2
      // Predicated region
      $region17: #{tpu_custom_call.1} parent=5 // pred_check
        %p106 = pneg %p105
      $region18: #{tpu_custom_call.1} parent=5 // pred_check_branch
        %108 = sbr.rel (%p106) target = $region20
      $region19: #{tpu_custom_call.1} parent=5 // pred_region
        // Predicated region
        $region21: #{tpu_custom_call.1} parent=19 // pred_check
          %p109 = pneg %p34
        $region22: #{tpu_custom_call.1} parent=19 // pred_check_branch
          %111 = sbr.rel (%p109) target = $region24
        $region23: #{tpu_custom_call.1} parent=19 // pred_region
          %s112 = sand.u32 %s24, 1
          %s113 = scalar_lea.sflag [#allocation3], %s112
          %s114 = sand.u32 %s24, 1
          %s115 = smul.addr %s114, 128
          %s116 = scalar_lea.vmem [#allocation2], %s115
          %s117 = smul.u32 32, %s14
          %s119 = ssub.s32 2048, 2048
          %120 = vsyncadd %s113, %s119
          %s121 = smul.addr %s117, 64
          %s122 = scalar_lea.hbm %s0, %s121
          %s123 = sshll.u32 %s116, 4
          %s124 = int_to_ptr.vmem [resolvable:$true] %s123
          %129 = dma.hbm_to_vmem [thread:$0]  %s122, 2048, %s124, %s113, 64, 64, 4
        $region24: #{tpu_custom_call.1} parent=19 // pred_fallthru
          _
      $region20: #{tpu_custom_call.1} parent=5 // pred_fallthru
        _
      %p130 = scmp.le.s32.totalorder 1, %s14
      %p131 = scmp.lt.s32.totalorder %s14, 3
      %p132 = pnand %p130, %p131
      %p133 = pneg %p132
      // Predicated region
      $region25: #{tpu_custom_call.1} parent=5 // pred_check
        _
      $region26: #{tpu_custom_call.1} parent=5 // pred_check_branch
        %135 = sbr.rel (%p132) target = $region28
      $region27: #{tpu_custom_call.1} parent=5 // pred_region
        %s136 = ssub.s32 %s14, 1
        %s137 = sand.u32 %s27, 1
        %s138 = scalar_lea.sflag [#allocation3], %s137
        %s139 = sand.u32 %s27, 1
        %s140 = smul.addr %s139, 128
        %s141 = scalar_lea.vmem [#allocation2], %s140
        // Predicated region
        $region29: #{tpu_custom_call.1} parent=27 // pred_check
          %p142 = pneg %p40
        $region30: #{tpu_custom_call.1} parent=27 // pred_check_branch
          %144 = sbr.rel (%p142) target = $region32
        $region31: #{tpu_custom_call.1} parent=27 // pred_region
          %145 = dma.done %s138, 2048
        $region32: #{tpu_custom_call.1} parent=27 // pred_fallthru
          _
        %s146 = sand.u32 %s27, 1
        %s147 = scalar_lea.sflag [#allocation3], %s146
        %s148 = sand.u32 %s27, 1
        %s149 = smul.addr %s148, 128
        %s150 = scalar_lea.vmem [#allocation2], %s149
        %p151 = pneg %p40
        %p152 = pneg %p37
        %p153 = pneg %p61
        %p154 = pneg %p58
        %p155 = pneg %p87
        %p156 = pneg %p84
        %s157 = sand.u32 %s74, 1
        %s158 = scalar_lea.sflag [#allocation4], %s157
        %s159 = sand.u32 %s74, 1
        %s160 = smul.addr %s159, 128
        %s161 = scalar_lea.vmem [#allocation5], %s160
        %s162 = smul.u32 32, %s19
        %s163 = smul.u32 32, %s19
        %v164 = vld [vmem:[%s141] sm:$0xf]
        %v165 = vld [vmem:[%s141 + $0x4] sm:$0xf]
        %v166 = vld [vmem:[%s141 + $0x8] sm:$0xf]
        %v167 = vld [vmem:[%s141 + $0xc] sm:$0xf]
        %v168 = vld [vmem:[%s141 + $0x10] sm:$0xf]
        %v169 = vld [vmem:[%s141 + $0x14] sm:$0xf]
        %v170 = vld [vmem:[%s141 + $0x18] sm:$0xf]
        %v171 = vld [vmem:[%s141 + $0x1c] sm:$0xf]
        %v172 = vld [vmem:[%s141 + $0x20] sm:$0xf]
        %v173 = vld [vmem:[%s141 + $0x24] sm:$0xf]
        %v174 = vld [vmem:[%s141 + $0x28] sm:$0xf]
        %v175 = vld [vmem:[%s141 + $0x2c] sm:$0xf]
        %v176 = vld [vmem:[%s141 + $0x30] sm:$0xf]
        %v177 = vld [vmem:[%s141 + $0x34] sm:$0xf]
        %v178 = vld [vmem:[%s141 + $0x38] sm:$0xf]
        %v179 = vld [vmem:[%s141 + $0x3c] sm:$0xf]
        %v180 = vld [vmem:[%s141 + $0x40] sm:$0xf]
        %v181 = vld [vmem:[%s141 + $0x44] sm:$0xf]
        %v182 = vld [vmem:[%s141 + $0x48] sm:$0xf]
        %v183 = vld [vmem:[%s141 + $0x4c] sm:$0xf]
        %v184 = vld [vmem:[%s141 + $0x50] sm:$0xf]
        %v185 = vld [vmem:[%s141 + $0x54] sm:$0xf]
        %v186 = vld [vmem:[%s141 + $0x58] sm:$0xf]
        %v187 = vld [vmem:[%s141 + $0x5c] sm:$0xf]
        %v188 = vld [vmem:[%s141 + $0x60] sm:$0xf]
        %v189 = vld [vmem:[%s141 + $0x64] sm:$0xf]
        %v190 = vld [vmem:[%s141 + $0x68] sm:$0xf]
        %v191 = vld [vmem:[%s141 + $0x6c] sm:$0xf]
        %v192 = vld [vmem:[%s141 + $0x70] sm:$0xf]
        %v193 = vld [vmem:[%s141 + $0x74] sm:$0xf]
        %v194 = vld [vmem:[%s141 + $0x78] sm:$0xf]
        %v195 = vld [vmem:[%s141 + $0x7c] sm:$0xf]
        %v196 = vunpack.c.l.bf16 %v164
        %v197 = vunpack.c.l.bf16 %v165
        %v198 = vunpack.c.l.bf16 %v166
        %v199 = vunpack.c.l.bf16 %v167
        %v200 = vunpack.c.l.bf16 %v168
        %v201 = vunpack.c.l.bf16 %v169
        %v202 = vunpack.c.l.bf16 %v170
        %v203 = vunpack.c.l.bf16 %v171
        %v204 = vunpack.c.l.bf16 %v172
        %v205 = vunpack.c.l.bf16 %v173
        %v206 = vunpack.c.l.bf16 %v174
        %v207 = vunpack.c.l.bf16 %v175
        %v208 = vunpack.c.l.bf16 %v176
        %v209 = vunpack.c.l.bf16 %v177
        %v210 = vunpack.c.l.bf16 %v178
        %v211 = vunpack.c.l.bf16 %v179
        %v212 = vunpack.c.l.bf16 %v180
        %v213 = vunpack.c.l.bf16 %v181
        %v214 = vunpack.c.l.bf16 %v182
        %v215 = vunpack.c.l.bf16 %v183
        %v216 = vunpack.c.l.bf16 %v184
        %v217 = vunpack.c.l.bf16 %v185
        %v218 = vunpack.c.l.bf16 %v186
        %v219 = vunpack.c.l.bf16 %v187
        %v220 = vunpack.c.l.bf16 %v188
        %v221 = vunpack.c.l.bf16 %v189
        %v222 = vunpack.c.l.bf16 %v190
        %v223 = vunpack.c.l.bf16 %v191
        %v224 = vunpack.c.l.bf16 %v192
        %v225 = vunpack.c.l.bf16 %v193
        %v226 = vunpack.c.l.bf16 %v194
        %v227 = vunpack.c.l.bf16 %v195
        %v228 = vmul.f32 %v196, %v196
        %v229 = vmul.f32 %v197, %v197
        %v230 = vmul.f32 %v198, %v198
        %v231 = vmul.f32 %v199, %v199
        %v232 = vmul.f32 %v200, %v200
        %v233 = vmul.f32 %v201, %v201
        %v234 = vmul.f32 %v202, %v202
        %v235 = vmul.f32 %v203, %v203
        %v236 = vmul.f32 %v204, %v204
        %v237 = vmul.f32 %v205, %v205
        %v238 = vmul.f32 %v206, %v206
        %v239 = vmul.f32 %v207, %v207
        %v240 = vmul.f32 %v208, %v208
        %v241 = vmul.f32 %v209, %v209
        %v242 = vmul.f32 %v210, %v210
        %v243 = vmul.f32 %v211, %v211
        %v244 = vmul.f32 %v212, %v212
        %v245 = vmul.f32 %v213, %v213
        %v246 = vmul.f32 %v214, %v214
        %v247 = vmul.f32 %v215, %v215
        %v248 = vmul.f32 %v216, %v216
        %v249 = vmul.f32 %v217, %v217
        %v250 = vmul.f32 %v218, %v218
        %v251 = vmul.f32 %v219, %v219
        %v252 = vmul.f32 %v220, %v220
        %v253 = vmul.f32 %v221, %v221
        %v254 = vmul.f32 %v222, %v222
        %v255 = vmul.f32 %v223, %v223
        %v256 = vmul.f32 %v224, %v224
        %v257 = vmul.f32 %v225, %v225
        %v258 = vmul.f32 %v226, %v226
        %v259 = vmul.f32 %v227, %v227
        %260 = vadd.xlane.f32.xlu0 %v228
        %v261 = vpop.xlane.xlu0 %260
        %262 = vadd.xlane.f32.xlu0 %v229
        %v263 = vpop.xlane.xlu0 %262
        %264 = vadd.xlane.f32.xlu0 %v230
        %v265 = vpop.xlane.xlu0 %264
        %266 = vadd.xlane.f32.xlu0 %v231
        %v267 = vpop.xlane.xlu0 %266
        %268 = vadd.xlane.f32.xlu0 %v232
        %v269 = vpop.xlane.xlu0 %268
        %270 = vadd.xlane.f32.xlu0 %v233
        %v271 = vpop.xlane.xlu0 %270
        %272 = vadd.xlane.f32.xlu0 %v234
        %v273 = vpop.xlane.xlu0 %272
        %274 = vadd.xlane.f32.xlu0 %v235
        %v275 = vpop.xlane.xlu0 %274
        %276 = vadd.xlane.f32.xlu0 %v236
        %v277 = vpop.xlane.xlu0 %276
        %278 = vadd.xlane.f32.xlu0 %v237
        %v279 = vpop.xlane.xlu0 %278
        %280 = vadd.xlane.f32.xlu0 %v238
        %v281 = vpop.xlane.xlu0 %280
        %282 = vadd.xlane.f32.xlu0 %v239
        %v283 = vpop.xlane.xlu0 %282
        %284 = vadd.xlane.f32.xlu0 %v240
        %v285 = vpop.xlane.xlu0 %284
        %286 = vadd.xlane.f32.xlu0 %v241
        %v287 = vpop.xlane.xlu0 %286
        %288 = vadd.xlane.f32.xlu0 %v242
        %v289 = vpop.xlane.xlu0 %288
        %290 = vadd.xlane.f32.xlu0 %v243
        %v291 = vpop.xlane.xlu0 %290
        %292 = vadd.xlane.f32.xlu0 %v244
        %v293 = vpop.xlane.xlu0 %292
        %294 = vadd.xlane.f32.xlu0 %v245
        %v295 = vpop.xlane.xlu0 %294
        %296 = vadd.xlane.f32.xlu0 %v246
        %v297 = vpop.xlane.xlu0 %296
        %298 = vadd.xlane.f32.xlu0 %v247
        %v299 = vpop.xlane.xlu0 %298
        %300 = vadd.xlane.f32.xlu0 %v248
        %v301 = vpop.xlane.xlu0 %300
        %302 = vadd.xlane.f32.xlu0 %v249
        %v303 = vpop.xlane.xlu0 %302
        %304 = vadd.xlane.f32.xlu0 %v250
        %v305 = vpop.xlane.xlu0 %304
        %306 = vadd.xlane.f32.xlu0 %v251
        %v307 = vpop.xlane.xlu0 %306
        %308 = vadd.xlane.f32.xlu0 %v252
        %v309 = vpop.xlane.xlu0 %308
        %310 = vadd.xlane.f32.xlu0 %v253
        %v311 = vpop.xlane.xlu0 %310
        %312 = vadd.xlane.f32.xlu0 %v254
        %v313 = vpop.xlane.xlu0 %312
        %314 = vadd.xlane.f32.xlu0 %v255
        %v315 = vpop.xlane.xlu0 %314
        %316 = vadd.xlane.f32.xlu0 %v256
        %v317 = vpop.xlane.xlu0 %316
        %318 = vadd.xlane.f32.xlu0 %v257
        %v319 = vpop.xlane.xlu0 %318
        %320 = vadd.xlane.f32.xlu0 %v258
        %v321 = vpop.xlane.xlu0 %320
        %322 = vadd.xlane.f32.xlu0 %v259
        %v323 = vpop.xlane.xlu0 %322
        %v324 = vrcp.pop 128.0
        %v325 = vmul.f32 %v261, %v324
        %v326 = vmul.f32 %v263, %v324
        %v327 = vmul.f32 %v265, %v324
        %v328 = vmul.f32 %v267, %v324
        %v329 = vmul.f32 %v269, %v324
        %v330 = vmul.f32 %v271, %v324
        %v331 = vmul.f32 %v273, %v324
        %v332 = vmul.f32 %v275, %v324
        %v333 = vmul.f32 %v277, %v324
        %v334 = vmul.f32 %v279, %v324
        %v335 = vmul.f32 %v281, %v324
        %v336 = vmul.f32 %v283, %v324
        %v337 = vmul.f32 %v285, %v324
        %v338 = vmul.f32 %v287, %v324
        %v339 = vmul.f32 %v289, %v324
        %v340 = vmul.f32 %v291, %v324
        %v341 = vmul.f32 %v293, %v324
        %v342 = vmul.f32 %v295, %v324
        %v343 = vmul.f32 %v297, %v324
        %v344 = vmul.f32 %v299, %v324
        %v345 = vmul.f32 %v301, %v324
        %v346 = vmul.f32 %v303, %v324
        %v347 = vmul.f32 %v305, %v324
        %v348 = vmul.f32 %v307, %v324
        %v349 = vmul.f32 %v309, %v324
        %v350 = vmul.f32 %v311, %v324
        %v351 = vmul.f32 %v313, %v324
        %v352 = vmul.f32 %v315, %v324
        %v353 = vmul.f32 %v317, %v324
        %v354 = vmul.f32 %v319, %v324
        %v355 = vmul.f32 %v321, %v324
        %v356 = vmul.f32 %v323, %v324
        %v357 = vadd.f32 %v325, 1e-05
        %v358 = vadd.f32 %v326, 1e-05
        %v359 = vadd.f32 %v327, 1e-05
        %v360 = vadd.f32 %v328, 1e-05
        %v361 = vadd.f32 %v329, 1e-05
        %v362 = vadd.f32 %v330, 1e-05
        %v363 = vadd.f32 %v331, 1e-05
        %v364 = vadd.f32 %v332, 1e-05
        %v365 = vadd.f32 %v333, 1e-05
        %v366 = vadd.f32 %v334, 1e-05
        %v367 = vadd.f32 %v335, 1e-05
        %v368 = vadd.f32 %v336, 1e-05
        %v369 = vadd.f32 %v337, 1e-05
        %v370 = vadd.f32 %v338, 1e-05
        %v371 = vadd.f32 %v339, 1e-05
        %v372 = vadd.f32 %v340, 1e-05
        %v373 = vadd.f32 %v341, 1e-05
        %v374 = vadd.f32 %v342, 1e-05
        %v375 = vadd.f32 %v343, 1e-05
        %v376 = vadd.f32 %v344, 1e-05
        %v377 = vadd.f32 %v345, 1e-05
        %v378 = vadd.f32 %v346, 1e-05
        %v379 = vadd.f32 %v347, 1e-05
        %v380 = vadd.f32 %v348, 1e-05
        %v381 = vadd.f32 %v349, 1e-05
        %v382 = vadd.f32 %v350, 1e-05
        %v383 = vadd.f32 %v351, 1e-05
        %v384 = vadd.f32 %v352, 1e-05
        %v385 = vadd.f32 %v353, 1e-05
        %v386 = vadd.f32 %v354, 1e-05
        %v387 = vadd.f32 %v355, 1e-05
        %v388 = vadd.f32 %v356, 1e-05
        %v389 = vrsqrt.pop %v357
        %v390 = vrsqrt.pop %v358
        %v391 = vrsqrt.pop %v359
        %v392 = vrsqrt.pop %v360
        %v393 = vrsqrt.pop %v361
        %v394 = vrsqrt.pop %v362
        %v395 = vrsqrt.pop %v363
        %v396 = vrsqrt.pop %v364
        %v397 = vrsqrt.pop %v365
        %v398 = vrsqrt.pop %v366
        %v399 = vrsqrt.pop %v367
        %v400 = vrsqrt.pop %v368
        %v401 = vrsqrt.pop %v369
        %v402 = vrsqrt.pop %v370
        %v403 = vrsqrt.pop %v371
        %v404 = vrsqrt.pop %v372
        %v405 = vrsqrt.pop %v373
        %v406 = vrsqrt.pop %v374
        %v407 = vrsqrt.pop %v375
        %v408 = vrsqrt.pop %v376
        %v409 = vrsqrt.pop %v377
        %v410 = vrsqrt.pop %v378
        %v411 = vrsqrt.pop %v379
        %v412 = vrsqrt.pop %v380
        %v413 = vrsqrt.pop %v381
        %v414 = vrsqrt.pop %v382
        %v415 = vrsqrt.pop %v383
        %v416 = vrsqrt.pop %v384
        %v417 = vrsqrt.pop %v385
        %v418 = vrsqrt.pop %v386
        %v419 = vrsqrt.pop %v387
        %v420 = vrsqrt.pop %v388
        %v421 = vmul.f32 %v196, %v389
        %v422 = vmul.f32 %v197, %v390
        %v423 = vmul.f32 %v198, %v391
        %v424 = vmul.f32 %v199, %v392
        %v425 = vmul.f32 %v200, %v393
        %v426 = vmul.f32 %v201, %v394
        %v427 = vmul.f32 %v202, %v395
        %v428 = vmul.f32 %v203, %v396
        %v429 = vmul.f32 %v204, %v397
        %v430 = vmul.f32 %v205, %v398
        %v431 = vmul.f32 %v206, %v399
        %v432 = vmul.f32 %v207, %v400
        %v433 = vmul.f32 %v208, %v401
        %v434 = vmul.f32 %v209, %v402
        %v435 = vmul.f32 %v210, %v403
        %v436 = vmul.f32 %v211, %v404
        %v437 = vmul.f32 %v212, %v405
        %v438 = vmul.f32 %v213, %v406
        %v439 = vmul.f32 %v214, %v407
        %v440 = vmul.f32 %v215, %v408
        %v441 = vmul.f32 %v216, %v409
        %v442 = vmul.f32 %v217, %v410
        %v443 = vmul.f32 %v218, %v411
        %v444 = vmul.f32 %v219, %v412
        %v445 = vmul.f32 %v220, %v413
        %v446 = vmul.f32 %v221, %v414
        %v447 = vmul.f32 %v222, %v415
        %v448 = vmul.f32 %v223, %v416
        %v449 = vmul.f32 %v224, %v417
        %v450 = vmul.f32 %v225, %v418
        %v451 = vmul.f32 %v226, %v419
        %v452 = vmul.f32 %v227, %v420
        %v453 = vld [vmem:[%s1] sm:$0x1]
        %v455 = vlaneseq
        %v456 = vshrl.u32 %v455, 7
        %v457 = vsub.s32 0, %v456
        %v458 = vrot.slane %v453, %v457
        %v460 = vmul.f32 %v421, %v458
        %v461 = vmul.f32 %v422, %v458
        %v462 = vmul.f32 %v423, %v458
        %v463 = vmul.f32 %v424, %v458
        %v464 = vmul.f32 %v425, %v458
        %v465 = vmul.f32 %v426, %v458
        %v466 = vmul.f32 %v427, %v458
        %v467 = vmul.f32 %v428, %v458
        %v468 = vmul.f32 %v429, %v458
        %v469 = vmul.f32 %v430, %v458
        %v470 = vmul.f32 %v431, %v458
        %v471 = vmul.f32 %v432, %v458
        %v472 = vmul.f32 %v433, %v458
        %v473 = vmul.f32 %v434, %v458
        %v474 = vmul.f32 %v435, %v458
        %v475 = vmul.f32 %v436, %v458
        %v476 = vmul.f32 %v437, %v458
        %v477 = vmul.f32 %v438, %v458
        %v478 = vmul.f32 %v439, %v458
        %v479 = vmul.f32 %v440, %v458
        %v480 = vmul.f32 %v441, %v458
        %v481 = vmul.f32 %v442, %v458
        %v482 = vmul.f32 %v443, %v458
        %v483 = vmul.f32 %v444, %v458
        %v484 = vmul.f32 %v445, %v458
        %v485 = vmul.f32 %v446, %v458
        %v486 = vmul.f32 %v447, %v458
        %v487 = vmul.f32 %v448, %v458
        %v488 = vmul.f32 %v449, %v458
        %v489 = vmul.f32 %v450, %v458
        %v490 = vmul.f32 %v451, %v458
        %v491 = vmul.f32 %v452, %v458
        %v492 = vpack.c.bf16 %v461, %v460
        %v493 = vpack.c.bf16 %v463, %v462
        %v494 = vpack.c.bf16 %v465, %v464
        %v495 = vpack.c.bf16 %v467, %v466
        %v496 = vpack.c.bf16 %v469, %v468
        %v497 = vpack.c.bf16 %v471, %v470
        %v498 = vpack.c.bf16 %v473, %v472
        %v499 = vpack.c.bf16 %v475, %v474
        %v500 = vpack.c.bf16 %v477, %v476
        %v501 = vpack.c.bf16 %v479, %v478
        %v502 = vpack.c.bf16 %v481, %v480
        %v503 = vpack.c.bf16 %v483, %v482
        %v504 = vpack.c.bf16 %v485, %v484
        %v505 = vpack.c.bf16 %v487, %v486
        %v506 = vpack.c.bf16 %v489, %v488
        %v507 = vpack.c.bf16 %v491, %v490
        %v524 = vunpack.c.l.b16 %v492
        %v525 = vunpack.c.h.b16 %v492
        %v526 = vunpack.c.l.b16 %v493
        %v527 = vunpack.c.h.b16 %v493
        %v528 = vunpack.c.l.b16 %v494
        %v529 = vunpack.c.h.b16 %v494
        %v530 = vunpack.c.l.b16 %v495
        %v531 = vunpack.c.h.b16 %v495
        %v532 = vunpack.c.l.b16 %v496
        %v533 = vunpack.c.h.b16 %v496
        %v534 = vunpack.c.l.b16 %v497
        %v535 = vunpack.c.h.b16 %v497
        %v536 = vunpack.c.l.b16 %v498
        %v537 = vunpack.c.h.b16 %v498
        %v538 = vunpack.c.l.b16 %v499
        %v539 = vunpack.c.h.b16 %v499
        %v540 = vunpack.c.l.b16 %v500
        %v541 = vunpack.c.h.b16 %v500
        %v542 = vunpack.c.l.b16 %v501
        %v543 = vunpack.c.h.b16 %v501
        %v544 = vunpack.c.l.b16 %v502
        %v545 = vunpack.c.h.b16 %v502
        %v546 = vunpack.c.l.b16 %v503
        %v547 = vunpack.c.h.b16 %v503
        %v548 = vunpack.c.l.b16 %v504
        %v549 = vunpack.c.h.b16 %v504
        %v550 = vunpack.c.l.b16 %v505
        %v551 = vunpack.c.h.b16 %v505
        %v552 = vunpack.c.l.b16 %v506
        %v553 = vunpack.c.h.b16 %v506
        %v554 = vunpack.c.l.b16 %v507
        %v555 = vunpack.c.h.b16 %v507
        %v556 = vpack.c.b16 %v524, %v524
        %v557 = vpack.c.b16 %v525, %v525
        %v558 = vpack.c.b16 %v526, %v526
        %v559 = vpack.c.b16 %v527, %v527
        %v560 = vpack.c.b16 %v528, %v528
        %v561 = vpack.c.b16 %v529, %v529
        %v562 = vpack.c.b16 %v530, %v530
        %v563 = vpack.c.b16 %v531, %v531
        %v564 = vpack.c.b16 %v532, %v532
        %v565 = vpack.c.b16 %v533, %v533
        %v566 = vpack.c.b16 %v534, %v534
        %v567 = vpack.c.b16 %v535, %v535
        %v568 = vpack.c.b16 %v536, %v536
        %v569 = vpack.c.b16 %v537, %v537
        %v570 = vpack.c.b16 %v538, %v538
        %v571 = vpack.c.b16 %v539, %v539
        %v572 = vpack.c.b16 %v540, %v540
        %v573 = vpack.c.b16 %v541, %v541
        %v574 = vpack.c.b16 %v542, %v542
        %v575 = vpack.c.b16 %v543, %v543
        %v576 = vpack.c.b16 %v544, %v544
        %v577 = vpack.c.b16 %v545, %v545
        %v578 = vpack.c.b16 %v546, %v546
        %v579 = vpack.c.b16 %v547, %v547
        %v580 = vpack.c.b16 %v548, %v548
        %v581 = vpack.c.b16 %v549, %v549
        %v582 = vpack.c.b16 %v550, %v550
        %v583 = vpack.c.b16 %v551, %v551
        %v584 = vpack.c.b16 %v552, %v552
        %v585 = vpack.c.b16 %v553, %v553
        %v586 = vpack.c.b16 %v554, %v554
        %v587 = vpack.c.b16 %v555, %v555
        %620 = vst [vmem:[%s161] sm:$0xf] %v556
        %621 = vst [vmem:[%s161 + $0x4] sm:$0xf] %v557
        %622 = vst [vmem:[%s161 + $0x8] sm:$0xf] %v558
        %623 = vst [vmem:[%s161 + $0xc] sm:$0xf] %v559
        %624 = vst [vmem:[%s161 + $0x10] sm:$0xf] %v560
        %625 = vst [vmem:[%s161 + $0x14] sm:$0xf] %v561
        %626 = vst [vmem:[%s161 + $0x18] sm:$0xf] %v562
        %627 = vst [vmem:[%s161 + $0x1c] sm:$0xf] %v563
        %628 = vst [vmem:[%s161 + $0x20] sm:$0xf] %v564
        %629 = vst [vmem:[%s161 + $0x24] sm:$0xf] %v565
        %630 = vst [vmem:[%s161 + $0x28] sm:$0xf] %v566
        %631 = vst [vmem:[%s161 + $0x2c] sm:$0xf] %v567
        %632 = vst [vmem:[%s161 + $0x30] sm:$0xf] %v568
        %633 = vst [vmem:[%s161 + $0x34] sm:$0xf] %v569
        %634 = vst [vmem:[%s161 + $0x38] sm:$0xf] %v570
        %635 = vst [vmem:[%s161 + $0x3c] sm:$0xf] %v571
        %636 = vst [vmem:[%s161 + $0x40] sm:$0xf] %v572
        %637 = vst [vmem:[%s161 + $0x44] sm:$0xf] %v573
        %638 = vst [vmem:[%s161 + $0x48] sm:$0xf] %v574
        %639 = vst [vmem:[%s161 + $0x4c] sm:$0xf] %v575
        %640 = vst [vmem:[%s161 + $0x50] sm:$0xf] %v576
        %641 = vst [vmem:[%s161 + $0x54] sm:$0xf] %v577
        %642 = vst [vmem:[%s161 + $0x58] sm:$0xf] %v578
        %643 = vst [vmem:[%s161 + $0x5c] sm:$0xf] %v579
        %644 = vst [vmem:[%s161 + $0x60] sm:$0xf] %v580
        %645 = vst [vmem:[%s161 + $0x64] sm:$0xf] %v581
        %646 = vst [vmem:[%s161 + $0x68] sm:$0xf] %v582
        %647 = vst [vmem:[%s161 + $0x6c] sm:$0xf] %v583
        %648 = vst [vmem:[%s161 + $0x70] sm:$0xf] %v584
        %649 = vst [vmem:[%s161 + $0x74] sm:$0xf] %v585
        %650 = vst [vmem:[%s161 + $0x78] sm:$0xf] %v586
        %651 = vst [vmem:[%s161 + $0x7c] sm:$0xf] %v587
        %s652 = sand.u32 %s74, 1
        %s653 = scalar_lea.sflag [#allocation4], %s652
        %s654 = sand.u32 %s74, 1
        %s655 = smul.addr %s654, 128
        %s656 = scalar_lea.vmem [#allocation5], %s655
        // Predicated region
        $region33: #{tpu_custom_call.1} parent=27 // pred_check
          %p657 = pneg %p84
        $region34: #{tpu_custom_call.1} parent=27 // pred_check_branch
          %659 = sbr.rel (%p657) target = $region36
        $region35: #{tpu_custom_call.1} parent=27 // pred_region
          %s660 = smul.u32 32, %s19
          %s662 = ssub.s32 2048, 2048
          %663 = vsyncadd %s653, %s662
          %s664 = smul.addr %s660, 64
          %s665 = scalar_lea.hbm %s2, %s664
          %s666 = sshll.u32 %s656, 4
          %s667 = int_to_ptr.vmem [resolvable:$true] %s666
          %672 = dma.vmem_to_hbm [thread:$0]  %s667, 2048, %s665, %s653, 64, 64, 4
        $region36: #{tpu_custom_call.1} parent=27 // pred_fallthru
          _
      $region28: #{tpu_custom_call.1} parent=5 // pred_fallthru
        _
      %p673 = scmp.le.s32.totalorder 2, %s14
      // Predicated region
      $region37: #{tpu_custom_call.1} parent=5 // pred_check
        %p674 = pneg %p673
      $region38: #{tpu_custom_call.1} parent=5 // pred_check_branch
        %676 = sbr.rel (%p674) target = $region40
      $region39: #{tpu_custom_call.1} parent=5 // pred_region
        %s677 = ssub.s32 %s14, 2
        // Predicated region
        $region41: #{tpu_custom_call.1} parent=39 // pred_check
          %p678 = pneg %p90
        $region42: #{tpu_custom_call.1} parent=39 // pred_check_branch
          %680 = sbr.rel (%p678) target = $region44
        $region43: #{tpu_custom_call.1} parent=39 // pred_region
          %s681 = sand.u32 %s75, 1
          %s682 = scalar_lea.sflag [#allocation4], %s681
          %s683 = sand.u32 %s75, 1
          %s684 = smul.addr %s683, 128
          %s685 = scalar_lea.vmem [#allocation5], %s684
          %686 = dma.done %s682, 2048
        $region44: #{tpu_custom_call.1} parent=39 // pred_fallthru
          _
      $region40: #{tpu_custom_call.1} parent=5 // pred_fallthru
        _
    $region6: #{tpu_custom_call.1} parent=1 // loop_footer
      %s18 = sadd.s32 1, %s14
    $region7: #{tpu_custom_call.1} parent=1 // loop_footer_branch
      %13 = sbr.rel target = $region3
    $region8: #{tpu_custom_call.1} parent=1 // loop_exit
      _
    %687 = vsyncpa [#allocation3], 1
    %s688 = scalar_lea.sflag [#allocation3], 1
    %689 = vsyncpa %s688, 1
    %690 = vsyncpa [#allocation4], 1
    %s691 = scalar_lea.sflag [#allocation4], 1
    %692 = vsyncpa %s691, 1

</llo_original>
